<compile_context>
chip_gen: v7x
topology: tpu7x:2x2x1
jax: 0.10.0
libtpu: 0.0.40
codegen_flags: <defaults>
</compile_context>

<pallas_src>
import jax
import jax.numpy as jnp
from jax.experimental import pallas as pl
from jax.experimental.pallas import tpu as pltpu

IN_DIM = 10
HID_DIM = 20
LANES = 128


def classifier1_kernel(xt_ref, w1_ref, b1_ref, w2_ref, b2_ref, o_ref):
    # xt_ref: (10, TILE_B)   feature-major input tile (batch on lanes)
    # w1_ref: (20, 10)       resident (PyTorch nn.Linear layout, no transpose)
    # b1_ref: (20, 1)        resident
    # w2_ref: (1, 20)        resident
    # b2_ref: (1,)           SMEM scalar
    # o_ref : (1, TILE_B)    lane-dense output row
    # ---- layer 1: hT = W1 @ xT + b1, ReLU  (M=20 MXU matmul + VPU) ----
    h = jnp.dot(w1_ref[...], xt_ref[...],
                preferred_element_type=jnp.float32)            # (20, TILE_B)
    h = jnp.maximum(h + b1_ref[...], 0.0)
    # ---- layer 2: (1, 20) @ (20, TILE_B) -> lane-dense (1, TILE_B) ----
    p = jnp.dot(w2_ref[...], h, preferred_element_type=jnp.float32)
    o_ref[...] = jax.nn.sigmoid(p + b2_ref[0]).astype(o_ref.dtype)


def classifier1_forward(x, w1, b1, w2, b2, *, tile_b=32768):
    """Forward pass of Classifier_1.

    x : (B, 10) float32
    w1: (20, 10), b1: (20,)  -- hidden_layer  (PyTorch nn.Linear layout)
    w2: (1, 20),  b2: (1,)   -- predict_layer (PyTorch nn.Linear layout)
    Returns (B, 1) float32 = sigmoid(predict_layer(relu(hidden_layer(x)))).

    tile_b: rows per grid step (multiple of 128).  32768 fits comfortably in
    the default scoped-VMEM on v5e/v6e/v7x; sweep per generation if desired.
    """
    assert tile_b % LANES == 0, "tile_b must be a multiple of 128"
    B, in_dim = x.shape
    assert in_dim == IN_DIM

    # Kernel-layout parameters (tiny one-off transposes/reshapes done by XLA).
    xt = jnp.asarray(x, jnp.float32).T                           # (10, B) feature-major
    w1_k = jnp.asarray(w1, jnp.float32).reshape(HID_DIM, IN_DIM)  # (20, 10)
    b1_k = jnp.asarray(b1, jnp.float32).reshape(HID_DIM, 1)      # (20, 1)
    w2_k = jnp.asarray(w2, jnp.float32).reshape(1, HID_DIM)      # (1, 20)
    b2_k = jnp.asarray(b2, jnp.float32).reshape(1)               # (1,)

    # Batch tiling: a single 128-aligned tile if everything fits in one tile,
    # otherwise tile_b-row tiles (zero-pad the batch; padded rows are sliced
    # off below, so their garbage sigmoid outputs never escape).
    b_128 = ((B + LANES - 1) // LANES) * LANES
    if b_128 <= tile_b:
        tile = b_128
        b_pad = b_128
    else:
        tile = tile_b
        b_pad = ((B + tile - 1) // tile) * tile
    if b_pad != B:
        xt = jnp.pad(xt, ((0, 0), (0, b_pad - B)))

    num_tiles = b_pad // tile

    out = pl.pallas_call(
        classifier1_kernel,
        out_shape=jax.ShapeDtypeStruct((1, b_pad), jnp.float32),
        grid=(num_tiles,),
        in_specs=[
            pl.BlockSpec((IN_DIM, tile), lambda i: (0, i)),       # xT tile
            pl.BlockSpec((HID_DIM, IN_DIM), lambda i: (0, 0)),    # w1 (resident)
            pl.BlockSpec((HID_DIM, 1), lambda i: (0, 0)),         # b1 (resident)
            pl.BlockSpec((1, HID_DIM), lambda i: (0, 0)),         # w2 (resident)
            pl.BlockSpec(memory_space=pltpu.MemorySpace.SMEM),    # b2 scalar
        ],
        out_specs=pl.BlockSpec((1, tile), lambda i: (0, i)),      # lane-dense row
        compiler_params=pltpu.CompilerParams(
            dimension_semantics=("parallel",),
        ),
    )(xt, w1_k, b1_k, w2_k, b2_k)

    # (1, b_pad) row-major == (b_pad, 1); drop padded batch rows.
    return out.reshape(b_pad, 1)[:B]


def init_params(key):
    """nn.Linear-layout params with the default U(-1/sqrt(fan_in), .) init."""
    k1, k2, k3, k4 = jax.random.split(key, 4)
    lim1 = 1.0 / jnp.sqrt(10.0)
    lim2 = 1.0 / jnp.sqrt(20.0)
    w1 = jax.random.uniform(k1, (HID_DIM, IN_DIM), jnp.float32, -lim1, lim1)  # (20,10)
    b1 = jax.random.uniform(k2, (HID_DIM,), jnp.float32, -lim1, lim1)         # (20,)
    w2 = jax.random.uniform(k3, (1, HID_DIM), jnp.float32, -lim2, lim2)       # (1,20)
    b2 = jax.random.uniform(k4, (1,), jnp.float32, -lim2, lim2)               # (1,)
    return w1, b1, w2, b2


def reference_forward(x, w1, b1, w2, b2):
    h = jnp.maximum(x @ w1.T + b1, 0.0)
    return jax.nn.sigmoid(h @ w2.T + b2)


if __name__ == "__main__":
    key = jax.random.PRNGKey(0)
    kx, kp = jax.random.split(key)
    params = init_params(kp)

    # Small single-tile case (exercises 128-padding) and a small multi-tile
    # case with tile_b=512 (exercises the batch grid, weight residency, and
    # the lane-dense output path) — both cheap enough for a quick smoke run.
    for batch, tile_b in ((8, 32768), (1500, 512)):
        x = jax.random.normal(jax.random.fold_in(kx, batch), (batch, IN_DIM),
                              jnp.float32)
        out = jax.block_until_ready(
            classifier1_forward(x, *params, tile_b=tile_b))
        ref = reference_forward(x, *params)
        assert out.shape == (batch, 1)
        assert jnp.allclose(out, ref, atol=1e-5, rtol=1e-5), (
            f"mismatch at batch={batch}: "
            f"max abs err {jnp.max(jnp.abs(out - ref))}")

    print("KERNEL_OK")
</pallas_src>

<mosaic_0001>
module attributes {stable_mosaic.version = 11 : i64} {
  func.func @classifier1_kernel(%arg0: i32, %arg1: memref<10x128xf32, #tpu.memory_space<vmem>>, %arg2: memref<20x10xf32, #tpu.memory_space<vmem>>, %arg3: memref<20x1xf32, #tpu.memory_space<vmem>>, %arg4: memref<1x20xf32, #tpu.memory_space<vmem>>, %arg5: memref<1xf32, #tpu.memory_space<smem>>, %arg6: memref<1x128xf32, #tpu.memory_space<vmem>>) attributes {dimension_semantics = [#tpu.dimension_semantics<parallel>], iteration_bounds = array<i64: 1>, scalar_prefetch = 0 : i64, scratch_operands = 0 : i64, tpu.core_type = #tpu.core_type<tc>, window_params = [{transform_indices = @transform_0, window_bounds = array<i64: 10, 128>}, {pipeline_mode = #tpu.pipeline_mode<synchronous>, transform_indices = @transform_1, window_bounds = array<i64: 20, 10>}, {pipeline_mode = #tpu.pipeline_mode<synchronous>, transform_indices = @transform_2, window_bounds = array<i64: 20, 1>}, {pipeline_mode = #tpu.pipeline_mode<synchronous>, transform_indices = @transform_3, window_bounds = array<i64: 1, 20>}, {transform_indices = @transform_4, window_bounds = array<i64: 1>}, {transform_indices = @transform_5, window_bounds = array<i64: 1, 128>}]} {
    %c0 = arith.constant 0 : index
    %c0_0 = arith.constant 0 : index
    %0 = vector.load %arg2[%c0, %c0_0] : memref<20x10xf32, #tpu.memory_space<vmem>>, vector<20x10xf32>
    %c0_1 = arith.constant 0 : index
    %c0_2 = arith.constant 0 : index
    %1 = vector.load %arg1[%c0_1, %c0_2] : memref<10x128xf32, #tpu.memory_space<vmem>>, vector<10x128xf32>
    %cst = arith.constant dense<0.000000e+00> : vector<20x128xf32>
    %2 = tpu.matmul %0, %1, %cst {dimension_numbers = #tpu.dot_dimension_numbers<[1], [0], [0], [1], [0, 0, 1, 1], [], []>} : vector<20x10xf32>, vector<10x128xf32>, vector<20x128xf32> -> vector<20x128xf32>
    %c0_3 = arith.constant 0 : index
    %c0_4 = arith.constant 0 : index
    %3 = vector.load %arg3[%c0_3, %c0_4] : memref<20x1xf32, #tpu.memory_space<vmem>>, vector<20x1xf32>
    %4 = vector.broadcast %3 : vector<20x1xf32> to vector<20x128xf32>
    %5 = arith.addf %2, %4 : vector<20x128xf32>
    %cst_5 = arith.constant 0.000000e+00 : f32
    %6 = vector.broadcast %cst_5 : f32 to vector<20x128xf32>
    %7 = arith.maximumf %5, %6 : vector<20x128xf32>
    %c0_6 = arith.constant 0 : index
    %c0_7 = arith.constant 0 : index
    %8 = vector.load %arg4[%c0_6, %c0_7] : memref<1x20xf32, #tpu.memory_space<vmem>>, vector<1x20xf32>
    %cst_8 = arith.constant dense<0.000000e+00> : vector<1x128xf32>
    %9 = tpu.matmul %8, %7, %cst_8 {dimension_numbers = #tpu.dot_dimension_numbers<[1], [0], [0], [1], [0, 0, 1, 1], [], []>} : vector<1x20xf32>, vector<20x128xf32>, vector<1x128xf32> -> vector<1x128xf32>
    %c0_9 = arith.constant 0 : index
    %10 = memref.load %arg5[%c0_9] : memref<1xf32, #tpu.memory_space<smem>>
    %11 = vector.broadcast %10 : f32 to vector<1x128xf32>
    %12 = arith.addf %9, %11 : vector<1x128xf32>
    %13 = arith.negf %12 : vector<1x128xf32>
    %14 = math.exp %13 : vector<1x128xf32>
    %cst_10 = arith.constant 1.000000e+00 : f32
    %15 = vector.broadcast %cst_10 : f32 to vector<1x128xf32>
    %16 = arith.addf %15, %14 : vector<1x128xf32>
    %17 = arith.divf %15, %16 : vector<1x128xf32>
    %c0_11 = arith.constant 0 : index
    %c0_12 = arith.constant 0 : index
    %18 = vector.load %arg6[%c0_11, %c0_12] : memref<1x128xf32, #tpu.memory_space<vmem>>, vector<1x128xf32>
    tpu.vector_store %arg6[%c0_11, %c0_12], %17 {strides = array<i32>} : memref<1x128xf32, #tpu.memory_space<vmem>>, vector<1x128xf32>,
    return
  }
  func.func @transform_0(%arg0: i32) -> (i32, i32) {
    %c0_i32 = arith.constant 0 : i32
    %c0_i32_0 = arith.constant 0 : i32
    return %c0_i32, %arg0 : i32, i32
  }
  func.func @transform_1(%arg0: i32) -> (i32, i32) {
    %c0_i32 = arith.constant 0 : i32
    %c0_i32_0 = arith.constant 0 : i32
    %c0_i32_1 = arith.constant 0 : i32
    return %c0_i32, %c0_i32_0 : i32, i32
  }
  func.func @transform_2(%arg0: i32) -> (i32, i32) {
    %c0_i32 = arith.constant 0 : i32
    %c0_i32_0 = arith.constant 0 : i32
    %c0_i32_1 = arith.constant 0 : i32
    return %c0_i32, %c0_i32_0 : i32, i32
  }
  func.func @transform_3(%arg0: i32) -> (i32, i32) {
    %c0_i32 = arith.constant 0 : i32
    %c0_i32_0 = arith.constant 0 : i32
    %c0_i32_1 = arith.constant 0 : i32
    return %c0_i32, %c0_i32_0 : i32, i32
  }
  func.func @transform_4(%arg0: i32) -> i32 {
    %c0_i32 = arith.constant 0 : i32
    %c0_i32_0 = arith.constant 0 : i32
    return %c0_i32 : i32
  }
  func.func @transform_5(%arg0: i32) -> (i32, i32) {
    %c0_i32 = arith.constant 0 : i32
    %c0_i32_0 = arith.constant 0 : i32
    return %c0_i32, %arg0 : i32, i32
  }
}

</mosaic_0001>

<llo_original>
// kernel: tpu_custom_call.1
$region0: #{tpu_custom_call.1}
  #allocation0 [shape = 'u32[]', space=smem, size = 0x4, offset = 0x4, fixed_abs, tag = 'smem constant byte address 0x4 - core index']
  #allocation1 [shape = 'u32[144,128]{1,0:T(1,128)}', space=vmem, size = 0x12000, scoped, tag = 'internal scratch']
  #allocation2 [shape = 'f32[1]{0:T(128)S(6)}', space=smem, size = 0x200, scoped, tag = 'scoped memory for tpu_custom_call.1']
  %s0 = inlined_call_operand.vmem [shape: f32[10,128], index: 0, kind: input, shape index: {}]
  %s1 = inlined_call_operand.vmem [shape: f32[20,10], index: 1, kind: input, shape index: {}]
  %s2 = inlined_call_operand.vmem [shape: f32[20,1], index: 2, kind: input, shape index: {}]
  %s3 = inlined_call_operand.vmem [shape: f32[1,20], index: 3, kind: input, shape index: {}]
  %s4 = inlined_call_operand.<no memory space> [shape: f32[1], index: 4, kind: input, shape index: {}]
  %s5 = inlined_call_operand.hbm [shape: f32[1,128], index: 5, kind: output, shape index: {}]
  %s6 = sld [smem:[#allocation0]]
  $region30: #{tpu_custom_call.1} parent=0
    _
  %s8 = ssub.s32 1, %s6
  %s9 = scalar_select 0, %s8, %s6
  %10 = sst [smem:[#allocation2]] %s4
  $region1: #{tpu_custom_call.1} parent=0
    #allocation3 [shape = 'u8[512]{0}', space=vmem, size = 0x400, scoped, tag = 'output window, operand 0, single buffered']
    #allocation4 [shape = 's32[1]{0}', space=sflag, size = 0x4, scoped, tag = 'scoped memory for tpu_custom_call.1']
    %11 = vsyncpa [#allocation4], 0
    // Predicated region
    $region2: #{tpu_custom_call.1} parent=1 // pred_check
      _
    $region3: #{tpu_custom_call.1} parent=1 // pred_check_branch
      %13 = sbr.rel (0) target = $region5
    $region4: #{tpu_custom_call.1} parent=1 // pred_region
      _
    $region5: #{tpu_custom_call.1} parent=1 // pred_fallthru
      _
    // Predicated region
    $region6: #{tpu_custom_call.1} parent=1 // pred_check
      _
    $region7: #{tpu_custom_call.1} parent=1 // pred_check_branch
      %15 = sbr.rel (0) target = $region9
    $region8: #{tpu_custom_call.1} parent=1 // pred_region
      _
    $region9: #{tpu_custom_call.1} parent=1 // pred_fallthru
      _
    // Predicated region
    $region10: #{tpu_custom_call.1} parent=1 // pred_check
      _
    $region11: #{tpu_custom_call.1} parent=1 // pred_check_branch
      %17 = sbr.rel (0) target = $region13
    $region12: #{tpu_custom_call.1} parent=1 // pred_region
      _
    $region13: #{tpu_custom_call.1} parent=1 // pred_fallthru
      _
    // Predicated region
    $region14: #{tpu_custom_call.1} parent=1 // pred_check
      _
    $region15: #{tpu_custom_call.1} parent=1 // pred_check_branch
      %19 = sbr.rel (0) target = $region17
    $region16: #{tpu_custom_call.1} parent=1 // pred_region
      _
    $region17: #{tpu_custom_call.1} parent=1 // pred_fallthru
      _
    // Predicated region
    $region18: #{tpu_custom_call.1} parent=1 // pred_check
      _
    $region19: #{tpu_custom_call.1} parent=1 // pred_check_branch
      %21 = sbr.rel (0) target = $region21
    $region20: #{tpu_custom_call.1} parent=1 // pred_region
      _
    $region21: #{tpu_custom_call.1} parent=1 // pred_fallthru
      _
    %v22 = vld [vmem:[%s1] sm:$0xff]
    %v23 = vld [vmem:[%s1 + $0x8] sm:$0xff]
    %v24 = vld [vmem:[%s1 + $0x10] sm:$0xf]
    %v25 = vld [vmem:[%s0] sm:$0xff]
    %v26 = vld [vmem:[%s0 + $0x8] sm:$0x3]
    %v27 = vld [vmem:[%s2] sm:$0xff]
    %v28 = vld [vmem:[%s2 + $0x8] sm:$0xff]
    %v29 = vld [vmem:[%s2 + $0x10] sm:$0xf]
    %31 = vset.pattern.permute.xlu0 0
    %32 = vperm.xlu0 %31, %v27
    %v33 = vpop.permute.xlu0 %32
    %36 = vset.pattern.permute.xlu0 0
    %37 = vperm.xlu0 %36, %v28
    %v38 = vpop.permute.xlu0 %37
    %41 = vset.pattern.permute.xlu0 0
    %42 = vperm.xlu0 %41, %v29
    %v43 = vpop.permute.xlu0 %42
    %vm45 = vcmask 80896
    %v47 = vsel %vm45, %v22, 0
    %v50 = vsel %vm45, %v23, 0
    %v53 = vsel %vm45, %v24, 0
    %vm55 = vcmask 1041408
    %v57 = vsel %vm55, %v26, 0
    %59 = vmatprep.subr.mxu0 0.0
    %60 = vmatpush1.msra.mxu0 %v25
    %61 = vmatprep.subr.mxu0 0.0
    %62 = vmatpush1.msra.mxu0 %v57
    %63 = vmatprep.subr.mxu0 0.0
    %64 = vmatpush1.msra.mxu0 0.0
    %65 = vmatprep.subr.mxu0 0.0
    %66 = vmatpush1.msra.mxu0 0.0
    %67 = vmatprep.subr.mxu0 0.0
    %68 = vmatpush1.msra.mxu0 0.0
    %69 = vmatprep.subr.mxu0 0.0
    %70 = vmatpush1.msra.mxu0 0.0
    %71 = vmatprep.subr.mxu0 0.0
    %72 = vmatpush1.msra.mxu0 0.0
    %73 = vmatprep.subr.mxu0 0.0
    %74 = vmatpush1.msra.mxu0 0.0
    %75 = vmatprep.subr.mxu0 0.0
    %76 = vmatpush1.msra.mxu0 0.0
    %77 = vmatprep.subr.mxu0 0.0
    %78 = vmatpush1.msra.mxu0 0.0
    %79 = vmatprep.subr.mxu0 0.0
    %80 = vmatpush1.msra.mxu0 0.0
    %81 = vmatprep.subr.mxu0 0.0
    %82 = vmatpush1.msra.mxu0 0.0
    %83 = vmatprep.subr.mxu0 0.0
    %84 = vmatpush1.msra.mxu0 0.0
    %85 = vmatprep.subr.mxu0 0.0
    %86 = vmatpush1.msra.mxu0 0.0
    %87 = vmatprep.subr.mxu0 0.0
    %88 = vmatpush1.msra.mxu0 0.0
    %89 = vmatprep.subr.mxu0 0.0
    %90 = vmatpush1.msra.mxu0 0.0
    %91 = vmatprep.subr.mxu0 0.0
    %92 = vmatpush1.msra.mxu0 0.0
    %93 = vmatprep.subr.mxu0 0.0
    %94 = vmatpush1.msra.mxu0 0.0
    %95 = vmatprep.subr.mxu0 0.0
    %96 = vmatpush1.msra.mxu0 0.0
    %97 = vmatprep.subr.mxu0 0.0
    %98 = vmatpush1.msra.mxu0 0.0
    %99 = vmatprep.subr.mxu0 0.0
    %100 = vmatpush1.msra.mxu0 0.0
    %101 = vmatprep.subr.mxu0 0.0
    %102 = vmatpush1.msra.mxu0 0.0
    %103 = vmatprep.subr.mxu0 0.0
    %104 = vmatpush1.msra.mxu0 0.0
    %105 = vmatprep.subr.mxu0 0.0
    %106 = vmatpush1.msra.mxu0 0.0
    %107 = vmatprep.subr.mxu0 0.0
    %108 = vmatpush1.msra.mxu0 0.0
    %109 = vmatprep.subr.mxu0 0.0
    %110 = vmatpush1.msra.mxu0 0.0
    %111 = vmatprep.subr.mxu0 0.0
    %112 = vmatpush1.msra.mxu0 0.0
    %113 = vmatprep.subr.mxu0 0.0
    %114 = vmatpush1.msra.mxu0 0.0
    %115 = vmatprep.subr.mxu0 0.0
    %116 = vmatpush1.msra.mxu0 0.0
    %117 = vmatprep.subr.mxu0 0.0
    %118 = vmatpush1.msra.mxu0 0.0
    %119 = vmatprep.subr.mxu0 0.0
    %120 = vmatpush1.msra.mxu0 0.0
    %121 = vmatprep.subr.mxu0 0.0
    %122 = vmatpush1.msra.mxu0 0.0
    %123 = vmatprep.mubr.f32.mxu0 0.0
    %124 = vmatmul.mubr.f32.gmra.mrb[0].mxu0 %v47
    %v125 = vpop.f32.mrb[0].mxu0
    %v126 = vadd.f32 %v33, %v125
    %v127 = vpop.f32.mrb[0].mxu0
    %128 = vmatprep.mubr.f32.mxu0 0.0
    %129 = vmatmul.mubr.f32.gmra.mrb[0].mxu0 %v50
    %v130 = vpop.f32.mrb[0].mxu0
    %v131 = vadd.f32 %v38, %v130
    %v132 = vpop.f32.mrb[0].mxu0
    %133 = vmatprep.mubr.f32.mxu0 0.0
    %134 = vmatmul.mubr.f32.gmra.mrb[0].mxu0 %v53
    %v135 = vpop.f32.mrb[0].mxu0
    %v136 = vadd.f32 %v43, %v135
    %v137 = vpop.f32.mrb[0].mxu0
    %138 = vdwg.mxu0
    %v139 = vmax.f32 %v126, 0.0
    %v140 = vmax.f32 %v131, 0.0
    %v141 = vmax.f32 %v136, 0.0
    %v142 = vld [vmem:[%s3] sm:$0x1]
    %s143 = sld [smem:[#allocation2]]
    %v144 = vstv %s143
    %vm145 = vcmask 162816
    %v147 = vsel %vm145, %v142, 0
    %vm149 = vcmask 1043456
    %v151 = vsel %vm149, %v141, 0
    %153 = vmatprep.subr.mxu0 0.0
    %154 = vmatpush1.msra.mxu0 %v139
    %155 = vmatprep.subr.mxu0 0.0
    %156 = vmatpush1.msra.mxu0 %v140
    %157 = vmatprep.subr.mxu0 0.0
    %158 = vmatpush1.msra.mxu0 %v151
    %159 = vmatprep.subr.mxu0 0.0
    %160 = vmatpush1.msra.mxu0 0.0
    %161 = vmatprep.subr.mxu0 0.0
    %162 = vmatpush1.msra.mxu0 0.0
    %163 = vmatprep.subr.mxu0 0.0
    %164 = vmatpush1.msra.mxu0 0.0
    %165 = vmatprep.subr.mxu0 0.0
    %166 = vmatpush1.msra.mxu0 0.0
    %167 = vmatprep.subr.mxu0 0.0
    %168 = vmatpush1.msra.mxu0 0.0
    %169 = vmatprep.subr.mxu0 0.0
    %170 = vmatpush1.msra.mxu0 0.0
    %171 = vmatprep.subr.mxu0 0.0
    %172 = vmatpush1.msra.mxu0 0.0
    %173 = vmatprep.subr.mxu0 0.0
    %174 = vmatpush1.msra.mxu0 0.0
    %175 = vmatprep.subr.mxu0 0.0
    %176 = vmatpush1.msra.mxu0 0.0
    %177 = vmatprep.subr.mxu0 0.0
    %178 = vmatpush1.msra.mxu0 0.0
    %179 = vmatprep.subr.mxu0 0.0
    %180 = vmatpush1.msra.mxu0 0.0
    %181 = vmatprep.subr.mxu0 0.0
    %182 = vmatpush1.msra.mxu0 0.0
    %183 = vmatprep.subr.mxu0 0.0
    %184 = vmatpush1.msra.mxu0 0.0
    %185 = vmatprep.subr.mxu0 0.0
    %186 = vmatpush1.msra.mxu0 0.0
    %187 = vmatprep.subr.mxu0 0.0
    %188 = vmatpush1.msra.mxu0 0.0
    %189 = vmatprep.subr.mxu0 0.0
    %190 = vmatpush1.msra.mxu0 0.0
    %191 = vmatprep.subr.mxu0 0.0
    %192 = vmatpush1.msra.mxu0 0.0
    %193 = vmatprep.subr.mxu0 0.0
    %194 = vmatpush1.msra.mxu0 0.0
    %195 = vmatprep.subr.mxu0 0.0
    %196 = vmatpush1.msra.mxu0 0.0
    %197 = vmatprep.subr.mxu0 0.0
    %198 = vmatpush1.msra.mxu0 0.0
    %199 = vmatprep.subr.mxu0 0.0
    %200 = vmatpush1.msra.mxu0 0.0
    %201 = vmatprep.subr.mxu0 0.0
    %202 = vmatpush1.msra.mxu0 0.0
    %203 = vmatprep.subr.mxu0 0.0
    %204 = vmatpush1.msra.mxu0 0.0
    %205 = vmatprep.subr.mxu0 0.0
    %206 = vmatpush1.msra.mxu0 0.0
    %207 = vmatprep.subr.mxu0 0.0
    %208 = vmatpush1.msra.mxu0 0.0
    %209 = vmatprep.subr.mxu0 0.0
    %210 = vmatpush1.msra.mxu0 0.0
    %211 = vmatprep.subr.mxu0 0.0
    %212 = vmatpush1.msra.mxu0 0.0
    %213 = vmatprep.subr.mxu0 0.0
    %214 = vmatpush1.msra.mxu0 0.0
    %215 = vmatprep.subr.mxu0 0.0
    %216 = vmatpush1.msra.mxu0 0.0
    %217 = vmatprep.mubr.f32.mxu0 0.0
    %218 = vmatmul.mubr.f32.gmra.mrb[0].mxu0 %v147
    %v219 = vpop.f32.mrb[0].mxu0
    %v220 = vadd.f32 %v144, %v219
    %v221 = vpop.f32.mrb[0].mxu0
    %222 = vdwg.mxu0
    %v223 = vxor.u32 %v220, 2147483648
    %v224 = vmul.f32 %v223, 1.442695
    %v225 = vpow.pop %v224
    %v226 = vadd.f32 %v225, 1.0
    %v227 = vrcp.pop %v226
    %v228 = vmul.f32 1.0, %v227
    %229 = vst [vmem:[#allocation3] sm:$0x1] %v228
    // Predicated region
    $region22: #{tpu_custom_call.1} parent=1 // pred_check
      _
    $region23: #{tpu_custom_call.1} parent=1 // pred_check_branch
      %231 = sbr.rel (0) target = $region25
    $region24: #{tpu_custom_call.1} parent=1 // pred_region
      %s233 = ssub.s32 16, 16
      %234 = vsyncadd [#allocation4], %s233
      %s236 = sshll.u32 [#allocation3], 4
      %s237 = int_to_ptr.vmem [resolvable:$true] %s236
      %239 = dma.vmem_to_hbm [thread:$0]  %s237, 16, %s5, [#allocation4]
    $region25: #{tpu_custom_call.1} parent=1 // pred_fallthru
      _
    // Predicated region
    $region26: #{tpu_custom_call.1} parent=1 // pred_check
      _
    $region27: #{tpu_custom_call.1} parent=1 // pred_check_branch
      %241 = sbr.rel (0) target = $region29
    $region28: #{tpu_custom_call.1} parent=1 // pred_region
      %242 = dma.done [#allocation4], 16
    $region29: #{tpu_custom_call.1} parent=1 // pred_fallthru
      _
    %243 = vsyncpa [#allocation4], 1

</llo_original>
